<compile_context>
chip_gen: v6e
topology: v6e:2x2x1
jax: 0.10.0
libtpu: 0.0.40
codegen_flags: <defaults>
</compile_context>

<pallas_src>
import functools

import jax
import jax.numpy as jnp
from jax import lax
from jax.experimental import pallas as pl
from jax.experimental.pallas import tpu as pltpu


def _round_up(x, m):
    return (x + m - 1) // m * m


def _mlp_kernel(x_ref, w1_ref, b1_ref, w2_ref, b2_ref, o_ref, acc_ref):
    # x_ref : (tm, in_p)      w1_ref: (th, in_p)    (torch layout tile of (hid, in))
    # b1_ref: (1, th)         w2_ref: (out_p, th)   (torch layout tile of (out, hid))
    # b2_ref: (1, out_p)      o_ref : (tm, out_p)   acc_ref: (tm, out_p) f32 scratch
    k = pl.program_id(1)

    @pl.when(k == 0)
    def _init():
        # Fold the second-layer bias into the accumulator init (added exactly once).
        acc_ref[...] = jnp.broadcast_to(
            b2_ref[...].astype(jnp.float32), acc_ref.shape)

    # First matmul: contract last dims of x and W1 (i.e. x @ W1^T), f32 accumulate.
    h = lax.dot_general(
        x_ref[...], w1_ref[...],
        dimension_numbers=(((1,), (1,)), ((), ())),
        preferred_element_type=jnp.float32)
    h = h + b1_ref[...].astype(jnp.float32)
    # Exact (erf-based) GELU, matches torch.nn.GELU() default.
    h = 0.5 * h * (1.0 + lax.erf(h * 0.7071067811865476))

    # Second matmul over this hid tile: h @ W2_tile^T, accumulate in f32 scratch.
    acc_ref[...] += lax.dot_general(
        h.astype(w2_ref.dtype), w2_ref[...],
        dimension_numbers=(((1,), (1,)), ((), ())),
        preferred_element_type=jnp.float32)

    @pl.when(k == pl.num_programs(1) - 1)
    def _finalize():
        o_ref[...] = acc_ref[...].astype(o_ref.dtype)


@functools.partial(jax.jit, static_argnames=("tm", "th"))
def mlp_pallas(x, w1, b1, w2, b2, *, tm=512, th=512):
    """x: (B, N, in_fs); w1: (hid, in), b1: (hid,), w2: (out, hid), b2: (out,).

    Weights are kept in torch nn.Linear layout (out_features, in_features);
    no transposes are emitted in the wrapper.
    """
    B, N, in_fs = x.shape
    hid_fs, _ = w1.shape
    out_fs, _ = w2.shape
    M = B * N

    # Lane-dense (128-aligned) padded dims; M padded to the row tile.
    in_p = _round_up(in_fs, 128)
    hid_p = _round_up(hid_fs, 128)
    out_p = _round_up(out_fs, 128)

    tm = max(8, min(tm, _round_up(M, 8)))   # don't over-pad tiny inputs
    th = min(_round_up(th, 128), hid_p)
    while hid_p % th:                       # th must evenly divide padded hid
        th -= 128
    m_p = _round_up(M, tm)

    # Zero-padding is numerically exact for this MLP (padded rows/cols add 0;
    # padded hidden lanes contribute GELU(b1_pad)=GELU(0)=0 through zero W2 cols).
    x2 = jnp.pad(x.reshape(M, in_fs), ((0, m_p - M), (0, in_p - in_fs)))
    w1p = jnp.pad(w1, ((0, hid_p - hid_fs), (0, in_p - in_fs)))
    b1p = jnp.pad(b1, (0, hid_p - hid_fs)).reshape(1, hid_p)
    w2p = jnp.pad(w2, ((0, out_p - out_fs), (0, hid_p - hid_fs)))
    b2p = jnp.pad(b2, (0, out_p - out_fs)).reshape(1, out_p)

    grid = (m_p // tm, hid_p // th)

    itemsize = jnp.dtype(x.dtype).itemsize
    cost = pl.CostEstimate(
        flops=2 * m_p * hid_p * (in_p + out_p),
        transcendentals=m_p * hid_p,
        bytes_accessed=itemsize * (m_p * in_p + hid_p * in_p + hid_p
                                   + out_p * hid_p + out_p + m_p * out_p),
    )

    out2 = pl.pallas_call(
        _mlp_kernel,
        out_shape=jax.ShapeDtypeStruct((m_p, out_p), x.dtype),
        grid_spec=pltpu.PrefetchScalarGridSpec(
            num_scalar_prefetch=0,
            grid=grid,
            in_specs=[
                pl.BlockSpec((tm, in_p), lambda i, k: (i, 0)),     # x rows
                pl.BlockSpec((th, in_p), lambda i, k: (k, 0)),     # W1 hid-tile
                pl.BlockSpec((1, th), lambda i, k: (0, k)),        # b1 hid-tile
                pl.BlockSpec((out_p, th), lambda i, k: (0, k)),    # W2 hid-tile
                pl.BlockSpec((1, out_p), lambda i, k: (0, 0)),     # b2 (constant)
            ],
            out_specs=pl.BlockSpec((tm, out_p), lambda i, k: (i, 0)),
            scratch_shapes=[pltpu.VMEM((tm, out_p), jnp.float32)],
        ),
        compiler_params=pltpu.CompilerParams(
            dimension_semantics=("parallel", "arbitrary"),
            vmem_limit_bytes=48 * 1024 * 1024,
        ),
        cost_estimate=cost,
    )(x2, w1p, b1p, w2p, b2p)

    return out2[:M, :out_fs].reshape(B, N, out_fs)


def _ref_mlp(x, w1, b1, w2, b2):
    h = jnp.einsum("bnd,hd->bnh", x, w1) + b1
    h = 0.5 * h * (1.0 + lax.erf(h / jnp.sqrt(2.0)))
    return jnp.einsum("bnh,oh->bno", h, w2) + b2


def _make_inputs(key, B, N, in_fs, hid_fs, out_fs):
    kx, kw1, kb1, kw2, kb2 = jax.random.split(key, 5)
    x = jax.random.normal(kx, (B, N, in_fs), dtype=jnp.float32)
    # torch nn.Linear weight layout: (out_features, in_features)
    lim1 = 1.0 / jnp.sqrt(in_fs)
    w1 = jax.random.uniform(kw1, (hid_fs, in_fs), minval=-lim1, maxval=lim1,
                            dtype=jnp.float32)
    b1 = jax.random.uniform(kb1, (hid_fs,), minval=-lim1, maxval=lim1,
                            dtype=jnp.float32)
    lim2 = 1.0 / jnp.sqrt(hid_fs)
    w2 = jax.random.uniform(kw2, (out_fs, hid_fs), minval=-lim2, maxval=lim2,
                            dtype=jnp.float32)
    b2 = jax.random.uniform(kb2, (out_fs,), minval=-lim2, maxval=lim2,
                            dtype=jnp.float32)
    return x, w1, b1, w2, b2


if __name__ == "__main__":
    key = jax.random.PRNGKey(0)
    k1, k2 = jax.random.split(key)

    # Small ViT-like shapes: batch=2, seq=8, in_fs=32, hid_fs=64, out_fs=32
    x, w1, b1, w2, b2 = _make_inputs(k1, 2, 8, 32, 64, 32)
    out = jax.block_until_ready(mlp_pallas(x, w1, b1, w2, b2))
    ref = _ref_mlp(x, w1, b1, w2, b2)
    assert out.shape == (2, 8, 32)
    assert jnp.allclose(out, ref, atol=1e-5, rtol=1e-5), "mismatch vs reference"

    # Second (still small) case that exercises multiple row tiles, multiple
    # hidden-reduction steps, and non-128-aligned padding in every dim.
    x, w1, b1, w2, b2 = _make_inputs(k2, 2, 16, 48, 256, 80)
    out = jax.block_until_ready(mlp_pallas(x, w1, b1, w2, b2, tm=8, th=128))
    ref = _ref_mlp(x, w1, b1, w2, b2)
    assert out.shape == (2, 16, 80)
    assert jnp.allclose(out, ref, atol=1e-5, rtol=1e-5), "mismatch (multi-tile)"

    print("KERNEL_OK")
</pallas_src>

<mosaic_0001>
module attributes {stable_mosaic.version = 11 : i64} {
  func.func @_mlp_kernel(%arg0: i32, %arg1: i32, %arg2: memref<16x128xf32, #tpu.memory_space<vmem>>, %arg3: memref<128x128xf32, #tpu.memory_space<vmem>>, %arg4: memref<1x128xf32, #tpu.memory_space<vmem>>, %arg5: memref<128x128xf32, #tpu.memory_space<vmem>>, %arg6: memref<1x128xf32, #tpu.memory_space<vmem>>, %arg7: memref<16x128xf32, #tpu.memory_space<vmem>>, %arg8: memref<16x128xf32, #tpu.memory_space<vmem>>) attributes {dimension_semantics = [#tpu.dimension_semantics<parallel>, #tpu.dimension_semantics<arbitrary>], iteration_bounds = array<i64: 1, 1>, scalar_prefetch = 0 : i64, scratch_operands = 1 : i64, tpu.core_type = #tpu.core_type<tc>, window_params = [{transform_indices = @transform_0, window_bounds = array<i64: 16, 128>}, {transform_indices = @transform_1, window_bounds = array<i64: 128, 128>}, {transform_indices = @transform_2, window_bounds = array<i64: 1, 128>}, {transform_indices = @transform_3, window_bounds = array<i64: 128, 128>}, {pipeline_mode = #tpu.pipeline_mode<synchronous>, transform_indices = @transform_4, window_bounds = array<i64: 1, 128>}, {transform_indices = @transform_5, window_bounds = array<i64: 16, 128>}]} {
    %c0_i32 = arith.constant 0 : i32
    %0 = arith.cmpi eq, %arg1, %c0_i32 : i32
    %1 = arith.extui %0 : i1 to i32
    %c0_i32_0 = arith.constant 0 : i32
    %2 = arith.cmpi ne, %1, %c0_i32_0 : i32
    scf.if %2 {
      %c0_18 = arith.constant 0 : index
      %c0_19 = arith.constant 0 : index
      %25 = vector.load %arg6[%c0_18, %c0_19] : memref<1x128xf32, #tpu.memory_space<vmem>>, vector<1x128xf32>
      %26 = vector.shape_cast %25 : vector<1x128xf32> to vector<1x128xf32>
      %27 = vector.broadcast %26 : vector<1x128xf32> to vector<16x128xf32>
      %c0_20 = arith.constant 0 : index
      %c0_21 = arith.constant 0 : index
      %28 = vector.load %arg8[%c0_20, %c0_21] : memref<16x128xf32, #tpu.memory_space<vmem>>, vector<16x128xf32>
      tpu.vector_store %arg8[%c0_20, %c0_21], %27 {strides = array<i32>} : memref<16x128xf32, #tpu.memory_space<vmem>>, vector<16x128xf32>,
    } else {
    }
    %c0 = arith.constant 0 : index
    %c0_1 = arith.constant 0 : index
    %3 = vector.load %arg2[%c0, %c0_1] : memref<16x128xf32, #tpu.memory_space<vmem>>, vector<16x128xf32>
    %c0_2 = arith.constant 0 : index
    %c0_3 = arith.constant 0 : index
    %4 = vector.load %arg3[%c0_2, %c0_3] : memref<128x128xf32, #tpu.memory_space<vmem>>, vector<128x128xf32>
    %cst = arith.constant dense<0.000000e+00> : vector<16x128xf32>
    %5 = tpu.matmul %3, %4, %cst {dimension_numbers = #tpu.dot_dimension_numbers<[1], [1], [0], [0], [0, 0, 1, 0], [], []>} : vector<16x128xf32>, vector<128x128xf32>, vector<16x128xf32> -> vector<16x128xf32>
    %c0_4 = arith.constant 0 : index
    %c0_5 = arith.constant 0 : index
    %6 = vector.load %arg4[%c0_4, %c0_5] : memref<1x128xf32, #tpu.memory_space<vmem>>, vector<1x128xf32>
    %7 = vector.broadcast %6 : vector<1x128xf32> to vector<16x128xf32>
    %8 = arith.addf %5, %7 : vector<16x128xf32>
    %cst_6 = arith.constant 5.000000e-01 : f32
    %9 = vector.broadcast %cst_6 : f32 to vector<16x128xf32>
    %10 = arith.mulf %9, %8 : vector<16x128xf32>
    %cst_7 = arith.constant 0.707106769 : f32
    %11 = vector.broadcast %cst_7 : f32 to vector<16x128xf32>
    %12 = arith.mulf %8, %11 : vector<16x128xf32>
    %13 = math.erf %12 : vector<16x128xf32>
    %cst_8 = arith.constant 1.000000e+00 : f32
    %14 = vector.broadcast %cst_8 : f32 to vector<16x128xf32>
    %15 = arith.addf %14, %13 : vector<16x128xf32>
    %16 = arith.mulf %10, %15 : vector<16x128xf32>
    %c0_9 = arith.constant 0 : index
    %c0_10 = arith.constant 0 : index
    %17 = vector.load %arg8[%c0_9, %c0_10] : memref<16x128xf32, #tpu.memory_space<vmem>>, vector<16x128xf32>
    %c0_11 = arith.constant 0 : index
    %c0_12 = arith.constant 0 : index
    %18 = vector.load %arg5[%c0_11, %c0_12] : memref<128x128xf32, #tpu.memory_space<vmem>>, vector<128x128xf32>
    %cst_13 = arith.constant dense<0.000000e+00> : vector<16x128xf32>
    %19 = tpu.matmul %16, %18, %cst_13 {dimension_numbers = #tpu.dot_dimension_numbers<[1], [1], [0], [0], [0, 0, 1, 0], [], []>} : vector<16x128xf32>, vector<128x128xf32>, vector<16x128xf32> -> vector<16x128xf32>
    %20 = arith.addf %17, %19 : vector<16x128xf32>
    %c0_14 = arith.constant 0 : index
    %c0_15 = arith.constant 0 : index
    %21 = vector.load %arg8[%c0_14, %c0_15] : memref<16x128xf32, #tpu.memory_space<vmem>>, vector<16x128xf32>
    tpu.vector_store %arg8[%c0_14, %c0_15], %20 {strides = array<i32>} : memref<16x128xf32, #tpu.memory_space<vmem>>, vector<16x128xf32>,
    %c0_i32_16 = arith.constant 0 : i32
    %22 = arith.cmpi eq, %arg1, %c0_i32_16 : i32
    %23 = arith.extui %22 : i1 to i32
    %c0_i32_17 = arith.constant 0 : i32
    %24 = arith.cmpi ne, %23, %c0_i32_17 : i32
    scf.if %24 {
      %c0_18 = arith.constant 0 : index
      %c0_19 = arith.constant 0 : index
      %25 = vector.load %arg8[%c0_18, %c0_19] : memref<16x128xf32, #tpu.memory_space<vmem>>, vector<16x128xf32>
      %c0_20 = arith.constant 0 : index
      %c0_21 = arith.constant 0 : index
      %26 = vector.load %arg7[%c0_20, %c0_21] : memref<16x128xf32, #tpu.memory_space<vmem>>, vector<16x128xf32>
      tpu.vector_store %arg7[%c0_20, %c0_21], %25 {strides = array<i32>} : memref<16x128xf32, #tpu.memory_space<vmem>>, vector<16x128xf32>,
    } else {
    }
    return
  }
  func.func @transform_0(%arg0: i32, %arg1: i32) -> (i32, i32) {
    %c0_i32 = arith.constant 0 : i32
    %c0_i32_0 = arith.constant 0 : i32
    return %arg0, %c0_i32 : i32, i32
  }
  func.func @transform_1(%arg0: i32, %arg1: i32) -> (i32, i32) {
    %c0_i32 = arith.constant 0 : i32
    %c0_i32_0 = arith.constant 0 : i32
    return %arg1, %c0_i32 : i32, i32
  }
  func.func @transform_2(%arg0: i32, %arg1: i32) -> (i32, i32) {
    %c0_i32 = arith.constant 0 : i32
    %c0_i32_0 = arith.constant 0 : i32
    return %c0_i32, %arg1 : i32, i32
  }
  func.func @transform_3(%arg0: i32, %arg1: i32) -> (i32, i32) {
    %c0_i32 = arith.constant 0 : i32
    %c0_i32_0 = arith.constant 0 : i32
    return %c0_i32, %arg1 : i32, i32
  }
  func.func @transform_4(%arg0: i32, %arg1: i32) -> (i32, i32) {
    %c0_i32 = arith.constant 0 : i32
    %c0_i32_0 = arith.constant 0 : i32
    %c0_i32_1 = arith.constant 0 : i32
    return %c0_i32, %c0_i32_0 : i32, i32
  }
  func.func @transform_5(%arg0: i32, %arg1: i32) -> (i32, i32) {
    %c0_i32 = arith.constant 0 : i32
    %c0_i32_0 = arith.constant 0 : i32
    return %arg0, %c0_i32 : i32, i32
  }
}

</mosaic_0001>

<llo_original>
// kernel: mlp_pallas.1
$region0: #{mlp_pallas.1}
  #allocation0 [shape = 'u32[]', space=smem, size = 0x4, offset = 0x4, fixed_abs, tag = 'smem constant byte address 0x4 - core index']
  #allocation1 [shape = 'u32[144,128]{1,0:T(1,128)}', space=vmem, size = 0x12000, scoped, tag = 'internal scratch']
  #allocation2 [shape = 'f32[16,128]{1,0:T(8,128)}', space=vmem, size = 0x2000, scoped, tag = 'scratch operand']
  %s0 = inlined_call_operand.vmem [shape: f32[16,128], index: 0, kind: input, shape index: {}]
  %s1 = inlined_call_operand.vmem [shape: f32[128,128], index: 1, kind: input, shape index: {}]
  %s2 = inlined_call_operand.vmem [shape: f32[1,128], index: 2, kind: input, shape index: {}]
  %s3 = inlined_call_operand.vmem [shape: f32[128,128], index: 3, kind: input, shape index: {}]
  %s4 = inlined_call_operand.vmem [shape: f32[1,128], index: 4, kind: input, shape index: {}]
  %s5 = inlined_call_operand.vmem [shape: f32[16,128], index: 5, kind: output, shape index: {}]
  %s6 = sld [smem:[#allocation0]]
  $region38: #{mlp_pallas.1} parent=0
    _
  %s8 = ssub.s32 1, %s6
  %s9 = scalar_select 0, %s8, %s6
  // Predicated region
  $region2: #{mlp_pallas.1} parent=0 // pred_check
    _
  $region3: #{mlp_pallas.1} parent=0 // pred_check_branch
    %11 = sbr.rel (0) target = $region5
  $region4: #{mlp_pallas.1} parent=0 // pred_region
    _
  $region5: #{mlp_pallas.1} parent=0 // pred_fallthru
    _
  // Predicated region
  $region6: #{mlp_pallas.1} parent=0 // pred_check
    _
  $region7: #{mlp_pallas.1} parent=0 // pred_check_branch
    %13 = sbr.rel (0) target = $region9
  $region8: #{mlp_pallas.1} parent=0 // pred_region
    _
  $region9: #{mlp_pallas.1} parent=0 // pred_fallthru
    _
  // Predicated region
  $region10: #{mlp_pallas.1} parent=0 // pred_check
    _
  $region11: #{mlp_pallas.1} parent=0 // pred_check_branch
    %15 = sbr.rel (0) target = $region13
  $region12: #{mlp_pallas.1} parent=0 // pred_region
    _
  $region13: #{mlp_pallas.1} parent=0 // pred_fallthru
    _
  // Predicated region
  $region14: #{mlp_pallas.1} parent=0 // pred_check
    _
  $region15: #{mlp_pallas.1} parent=0 // pred_check_branch
    %17 = sbr.rel (0) target = $region17
  $region16: #{mlp_pallas.1} parent=0 // pred_region
    _
  $region17: #{mlp_pallas.1} parent=0 // pred_fallthru
    _
  // Predicated region
  $region18: #{mlp_pallas.1} parent=0 // pred_check
    _
  $region19: #{mlp_pallas.1} parent=0 // pred_check_branch
    %19 = sbr.rel (0) target = $region21
  $region20: #{mlp_pallas.1} parent=0 // pred_region
    _
  $region21: #{mlp_pallas.1} parent=0 // pred_fallthru
    _
  %p20 = scmp.eq.s32.totalorder 0, 0
  // Predicated region
  $region22: #{mlp_pallas.1} parent=0 // pred_check
    %p21 = pneg %p20
  $region23: #{mlp_pallas.1} parent=0 // pred_check_branch
    %23 = sbr.rel (%p21) target = $region25
  $region24: #{mlp_pallas.1} parent=0 // pred_region
    %v24 = vld [vmem:[%s4] sm:$0x1]
    %v26 = vlaneseq
    %v27 = vshrl.u32 %v26, 7
    %v28 = vsub.s32 0, %v27
    %v29 = vrot.slane %v24, %v28
    %31 = vst [vmem:[#allocation2] sm:$0xff] %v29
    %32 = vst [vmem:[#allocation2 + $0x8] sm:$0xff] %v29
  $region25: #{mlp_pallas.1} parent=0 // pred_fallthru
    _
  %v33 = vld [vmem:[%s0] sm:$0xff]
  %v34 = vld [vmem:[%s0 + $0x8] sm:$0xff]
  %v35 = vld [vmem:[%s1] sm:$0xff]
  %v36 = vld [vmem:[%s1 + $0x8] sm:$0xff]
  %v37 = vld [vmem:[%s1 + $0x10] sm:$0xff]
  %v38 = vld [vmem:[%s1 + $0x18] sm:$0xff]
  %v39 = vld [vmem:[%s1 + $0x20] sm:$0xff]
  %v40 = vld [vmem:[%s1 + $0x28] sm:$0xff]
  %v41 = vld [vmem:[%s1 + $0x30] sm:$0xff]
  %v42 = vld [vmem:[%s1 + $0x38] sm:$0xff]
  %v43 = vld [vmem:[%s1 + $0x40] sm:$0xff]
  %v44 = vld [vmem:[%s1 + $0x48] sm:$0xff]
  %v45 = vld [vmem:[%s1 + $0x50] sm:$0xff]
  %v46 = vld [vmem:[%s1 + $0x58] sm:$0xff]
  %v47 = vld [vmem:[%s1 + $0x60] sm:$0xff]
  %v48 = vld [vmem:[%s1 + $0x68] sm:$0xff]
  %v49 = vld [vmem:[%s1 + $0x70] sm:$0xff]
  %v50 = vld [vmem:[%s1 + $0x78] sm:$0xff]
  %v51 = vld [vmem:[%s2] sm:$0x1]
  %v53 = vlaneseq
  %v54 = vshrl.u32 %v53, 7
  %v55 = vsub.s32 0, %v54
  %v56 = vrot.slane %v51, %v55
  %58 = vmatprep.subr.mxu0 0.0
  %59 = vmatpush1.xpose.msra.mxu0 %v50
  %60 = vmatprep.subr.mxu0 0.0
  %61 = vmatpush1.xpose.msra.mxu0 %v49
  %62 = vmatprep.subr.mxu0 0.0
  %63 = vmatpush1.xpose.msra.mxu0 %v48
  %64 = vmatprep.subr.mxu0 0.0
  %65 = vmatpush1.xpose.msra.mxu0 %v47
  %66 = vmatprep.subr.mxu0 0.0
  %67 = vmatpush1.xpose.msra.mxu0 %v46
  %68 = vmatprep.subr.mxu0 0.0
  %69 = vmatpush1.xpose.msra.mxu0 %v45
  %70 = vmatprep.subr.mxu0 0.0
  %71 = vmatpush1.xpose.msra.mxu0 %v44
  %72 = vmatprep.subr.mxu0 0.0
  %73 = vmatpush1.xpose.msra.mxu0 %v43
  %74 = vmatprep.subr.mxu0 0.0
  %75 = vmatpush1.xpose.msra.mxu0 %v42
  %76 = vmatprep.subr.mxu0 0.0
  %77 = vmatpush1.xpose.msra.mxu0 %v41
  %78 = vmatprep.subr.mxu0 0.0
  %79 = vmatpush1.xpose.msra.mxu0 %v40
  %80 = vmatprep.subr.mxu0 0.0
  %81 = vmatpush1.xpose.msra.mxu0 %v39
  %82 = vmatprep.subr.mxu0 0.0
  %83 = vmatpush1.xpose.msra.mxu0 %v38
  %84 = vmatprep.subr.mxu0 0.0
  %85 = vmatpush1.xpose.msra.mxu0 %v37
  %86 = vmatprep.subr.mxu0 0.0
  %87 = vmatpush1.xpose.msra.mxu0 %v36
  %88 = vmatprep.subr.mxu0 0.0
  %89 = vmatpush1.xpose.msra.mxu0 %v35
  %90 = vmatprep.subr.mxu0 0.0
  %91 = vmatpush2.xpose.msra.mxu0 0.0
  %92 = vmatprep.subr.mxu0 0.0
  %93 = vmatpush2.xpose.msra.mxu0 0.0
  %94 = vmatprep.subr.mxu0 0.0
  %95 = vmatpush2.xpose.msra.mxu0 0.0
  %96 = vmatprep.subr.mxu0 0.0
  %97 = vmatpush2.xpose.msra.mxu0 0.0
  %98 = vmatprep.subr.mxu0 0.0
  %99 = vmatpush2.xpose.msra.mxu0 0.0
  %100 = vmatprep.subr.mxu0 0.0
  %101 = vmatpush2.xpose.msra.mxu0 0.0
  %102 = vmatprep.subr.mxu0 0.0
  %103 = vmatpush2.xpose.msra.mxu0 0.0
  %104 = vmatprep.subr.mxu0 0.0
  %105 = vmatpush2.xpose.msra.mxu0 0.0
  %106 = vmatprep.subr.mxu0 0.0
  %107 = vmatpush2.xpose.msra.mxu0 0.0
  %108 = vmatprep.subr.mxu0 0.0
  %109 = vmatpush2.xpose.msra.mxu0 0.0
  %110 = vmatprep.subr.mxu0 0.0
  %111 = vmatpush2.xpose.msra.mxu0 0.0
  %112 = vmatprep.subr.mxu0 0.0
  %113 = vmatpush2.xpose.msra.mxu0 0.0
  %114 = vmatprep.subr.mxu0 0.0
  %115 = vmatpush2.xpose.msra.mxu0 0.0
  %116 = vmatprep.subr.mxu0 0.0
  %117 = vmatpush2.xpose.msra.mxu0 0.0
  %118 = vmatprep.subr.mxu0 0.0
  %119 = vmatpush2.xpose.msra.mxu0 0.0
  %120 = vmatprep.subr.mxu0 0.0
  %121 = vmatpush2.xpose.msra.mxu0 0.0
  %122 = vmatprep.mubr.f32.mxu0 0.0
  %123 = vmatmul.mubr.f32.gmra.mxu0 %v33
  %v124 = vpop.f32.mrf.mxu0
  %v125 = vadd.f32 %v56, %v124
  %v126 = vpop.f32.mrf.mxu0
  %127 = vmatprep.mubr.f32.mxu0 0.0
  %128 = vmatmul.mubr.f32.gmra.mxu0 %v34
  %v129 = vpop.f32.mrf.mxu0
  %v130 = vadd.f32 %v56, %v129
  %v131 = vpop.f32.mrf.mxu0
  %132 = vdwg.mxu0
  %v133 = vmul.f32 %v125, 0.5
  %v134 = vmul.f32 %v130, 0.5
  %v135 = vmul.f32 %v125, 0.70710677
  %v136 = vmul.f32 %v130, 0.70710677
  %v137 = verf.f32.pop %v135
  %v138 = verf.f32.pop %v136
  %v139 = vadd.f32 %v137, 1.0
  %v140 = vadd.f32 %v138, 1.0
  %v141 = vmul.f32 %v133, %v139
  %v142 = vmul.f32 %v134, %v140
  %v143 = vld [vmem:[#allocation2] sm:$0xff]
  %v144 = vld [vmem:[#allocation2 + $0x8] sm:$0xff]
  %v145 = vld [vmem:[%s3] sm:$0xff]
  %v146 = vld [vmem:[%s3 + $0x8] sm:$0xff]
  %v147 = vld [vmem:[%s3 + $0x10] sm:$0xff]
  %v148 = vld [vmem:[%s3 + $0x18] sm:$0xff]
  %v149 = vld [vmem:[%s3 + $0x20] sm:$0xff]
  %v150 = vld [vmem:[%s3 + $0x28] sm:$0xff]
  %v151 = vld [vmem:[%s3 + $0x30] sm:$0xff]
  %v152 = vld [vmem:[%s3 + $0x38] sm:$0xff]
  %v153 = vld [vmem:[%s3 + $0x40] sm:$0xff]
  %v154 = vld [vmem:[%s3 + $0x48] sm:$0xff]
  %v155 = vld [vmem:[%s3 + $0x50] sm:$0xff]
  %v156 = vld [vmem:[%s3 + $0x58] sm:$0xff]
  %v157 = vld [vmem:[%s3 + $0x60] sm:$0xff]
  %v158 = vld [vmem:[%s3 + $0x68] sm:$0xff]
  %v159 = vld [vmem:[%s3 + $0x70] sm:$0xff]
  %v160 = vld [vmem:[%s3 + $0x78] sm:$0xff]
  %161 = vmatprep.subr.mxu0 0.0
  %162 = vmatpush1.xpose.msra.mxu0 %v160
  %163 = vmatprep.subr.mxu0 0.0
  %164 = vmatpush1.xpose.msra.mxu0 %v159
  %165 = vmatprep.subr.mxu0 0.0
  %166 = vmatpush1.xpose.msra.mxu0 %v158
  %167 = vmatprep.subr.mxu0 0.0
  %168 = vmatpush1.xpose.msra.mxu0 %v157
  %169 = vmatprep.subr.mxu0 0.0
  %170 = vmatpush1.xpose.msra.mxu0 %v156
  %171 = vmatprep.subr.mxu0 0.0
  %172 = vmatpush1.xpose.msra.mxu0 %v155
  %173 = vmatprep.subr.mxu0 0.0
  %174 = vmatpush1.xpose.msra.mxu0 %v154
  %175 = vmatprep.subr.mxu0 0.0
  %176 = vmatpush1.xpose.msra.mxu0 %v153
  %177 = vmatprep.subr.mxu0 0.0
  %178 = vmatpush1.xpose.msra.mxu0 %v152
  %179 = vmatprep.subr.mxu0 0.0
  %180 = vmatpush1.xpose.msra.mxu0 %v151
  %181 = vmatprep.subr.mxu0 0.0
  %182 = vmatpush1.xpose.msra.mxu0 %v150
  %183 = vmatprep.subr.mxu0 0.0
  %184 = vmatpush1.xpose.msra.mxu0 %v149
  %185 = vmatprep.subr.mxu0 0.0
  %186 = vmatpush1.xpose.msra.mxu0 %v148
  %187 = vmatprep.subr.mxu0 0.0
  %188 = vmatpush1.xpose.msra.mxu0 %v147
  %189 = vmatprep.subr.mxu0 0.0
  %190 = vmatpush1.xpose.msra.mxu0 %v146
  %191 = vmatprep.subr.mxu0 0.0
  %192 = vmatpush1.xpose.msra.mxu0 %v145
  %193 = vmatprep.subr.mxu0 0.0
  %194 = vmatpush2.xpose.msra.mxu0 0.0
  %195 = vmatprep.subr.mxu0 0.0
  %196 = vmatpush2.xpose.msra.mxu0 0.0
  %197 = vmatprep.subr.mxu0 0.0
  %198 = vmatpush2.xpose.msra.mxu0 0.0
  %199 = vmatprep.subr.mxu0 0.0
  %200 = vmatpush2.xpose.msra.mxu0 0.0
  %201 = vmatprep.subr.mxu0 0.0
  %202 = vmatpush2.xpose.msra.mxu0 0.0
  %203 = vmatprep.subr.mxu0 0.0
  %204 = vmatpush2.xpose.msra.mxu0 0.0
  %205 = vmatprep.subr.mxu0 0.0
  %206 = vmatpush2.xpose.msra.mxu0 0.0
  %207 = vmatprep.subr.mxu0 0.0
  %208 = vmatpush2.xpose.msra.mxu0 0.0
  %209 = vmatprep.subr.mxu0 0.0
  %210 = vmatpush2.xpose.msra.mxu0 0.0
  %211 = vmatprep.subr.mxu0 0.0
  %212 = vmatpush2.xpose.msra.mxu0 0.0
  %213 = vmatprep.subr.mxu0 0.0
  %214 = vmatpush2.xpose.msra.mxu0 0.0
  %215 = vmatprep.subr.mxu0 0.0
  %216 = vmatpush2.xpose.msra.mxu0 0.0
  %217 = vmatprep.subr.mxu0 0.0
  %218 = vmatpush2.xpose.msra.mxu0 0.0
  %219 = vmatprep.subr.mxu0 0.0
  %220 = vmatpush2.xpose.msra.mxu0 0.0
  %221 = vmatprep.subr.mxu0 0.0
  %222 = vmatpush2.xpose.msra.mxu0 0.0
  %223 = vmatprep.subr.mxu0 0.0
  %224 = vmatpush2.xpose.msra.mxu0 0.0
  %225 = vmatprep.mubr.f32.mxu0 0.0
  %226 = vmatmul.mubr.f32.gmra.mxu0 %v141
  %v227 = vpop.f32.mrf.mxu0
  %v228 = vadd.f32 0.0, %v227
  %v229 = vpop.f32.mrf.mxu0
  %230 = vmatprep.mubr.f32.mxu0 0.0
  %231 = vmatmul.mubr.f32.gmra.mxu0 %v142
  %v232 = vpop.f32.mrf.mxu0
  %v233 = vadd.f32 0.0, %v232
  %v234 = vpop.f32.mrf.mxu0
  %235 = vdwg.mxu0
  %v236 = vadd.f32 %v143, %v228
  %v237 = vadd.f32 %v144, %v233
  %238 = vst [vmem:[#allocation2] sm:$0xff] %v236
  %239 = vst [vmem:[#allocation2 + $0x8] sm:$0xff] %v237
  // Predicated region
  $region26: #{mlp_pallas.1} parent=0 // pred_check
    %p240 = pneg %p20
  $region27: #{mlp_pallas.1} parent=0 // pred_check_branch
    %242 = sbr.rel (%p240) target = $region29
  $region28: #{mlp_pallas.1} parent=0 // pred_region
    %v243 = vld [vmem:[#allocation2] sm:$0xff]
    %v244 = vld [vmem:[#allocation2 + $0x8] sm:$0xff]
    %245 = vst [vmem:[%s5] sm:$0xff] %v243
    %246 = vst [vmem:[%s5 + $0x8] sm:$0xff] %v244
  $region29: #{mlp_pallas.1} parent=0 // pred_fallthru
    _
  // Predicated region
  $region30: #{mlp_pallas.1} parent=0 // pred_check
    _
  $region31: #{mlp_pallas.1} parent=0 // pred_check_branch
    %248 = sbr.rel (0) target = $region33
  $region32: #{mlp_pallas.1} parent=0 // pred_region
    _
  $region33: #{mlp_pallas.1} parent=0 // pred_fallthru
    _
  // Predicated region
  $region34: #{mlp_pallas.1} parent=0 // pred_check
    _
  $region35: #{mlp_pallas.1} parent=0 // pred_check_branch
    %250 = sbr.rel (0) target = $region37
  $region36: #{mlp_pallas.1} parent=0 // pred_region
    _
  $region37: #{mlp_pallas.1} parent=0 // pred_fallthru
    _

</llo_original>
